<compile_context>
chip_gen: v7x
topology: tpu7x:2x2x1
jax: 0.10.0
libtpu: 0.0.40
codegen_flags: <defaults>
</compile_context>

<pallas_src>
import functools

import jax
import jax.numpy as jnp
from jax.experimental import pallas as pl
from jax.experimental.pallas import tpu as pltpu

BN_EPS = 1e-5
LANE = 128


def _round_up(v, m):
    return ((v + m - 1) // m) * m


def _pad2(a, rows, cols):
    return jnp.pad(a, ((0, rows - a.shape[0]), (0, cols - a.shape[1])))


def _mosaic_params(blocks):
    """blocks: [(block_shape, dtype), ...] for every in/out block of a call."""
    total = 0
    for shape, dtype in blocks:
        n = 1
        for d in shape:
            n *= int(d)
        total += 2 * n * jnp.dtype(dtype).itemsize   # double-buffered blocks
    total += 4 << 20                                  # compiler headroom
    return pltpu.CompilerParams(
        dimension_semantics=("parallel",),
        vmem_limit_bytes=int(min(total, 64 << 20)),
    )


# --------------------------------------------------------------------------
# Kernels
# --------------------------------------------------------------------------
def _affine_transform_kernel(z_ref, scale_ref, shift_ref, w_ref, out_ref):
    """out = (z * scale + shift) @ W  (row-tiled; bf16 MXU inputs, f32 acc)."""
    z = z_ref[...].astype(jnp.float32) * scale_ref[...] + shift_ref[...]
    zw = jnp.dot(z.astype(jnp.bfloat16), w_ref[...],
                 preferred_element_type=jnp.float32)
    out_ref[...] = zw.astype(out_ref.dtype)


def _aggregate_stats_kernel(a_ref, zw_ref, b_ref, h_ref, sum_ref, sq_ref, *,
                            n_valid, tile_n):
    """H_tile = relu(A_tile @ ZW + b); also masked partial sums for global BN."""
    h = jnp.dot(a_ref[...], zw_ref[...], preferred_element_type=jnp.float32)
    h = jnp.maximum(h + b_ref[...], 0.0)
    h_ref[...] = h
    # exclude zero-padded rows (>= n_valid) from the BatchNorm statistics
    row = pl.program_id(0) * tile_n + jax.lax.broadcasted_iota(
        jnp.int32, h.shape, 0)
    hm = jnp.where(row < n_valid, h, 0.0)
    sum_ref[...] = jnp.sum(hm, axis=0, keepdims=True)[None]
    sq_ref[...] = jnp.sum(hm * hm, axis=0, keepdims=True)[None]


def _aggregate_head_kernel(a_ref, zw_ref, b_ref, wf_ref, bf_ref, out_ref):
    """H_tile = relu(A_tile @ ZW + b); Dropout=identity (eval); fc + sigmoid."""
    h = jnp.dot(a_ref[...], zw_ref[...], preferred_element_type=jnp.float32)
    h = jnp.maximum(h + b_ref[...], 0.0)
    logits = jnp.dot(h, wf_ref[...], preferred_element_type=jnp.float32)
    out_ref[...] = jax.nn.sigmoid(logits + bf_ref[...])


# --------------------------------------------------------------------------
# pallas_call wrappers
# --------------------------------------------------------------------------
def _run_transform(z, scale, shift, w, tile_n):
    n_pad, in_dim = z.shape
    out_dim = w.shape[1]
    return pl.pallas_call(
        _affine_transform_kernel,
        out_shape=jax.ShapeDtypeStruct((n_pad, out_dim), jnp.bfloat16),
        grid=(n_pad // tile_n,),
        in_specs=[
            pl.BlockSpec((tile_n, in_dim), lambda i: (i, 0)),
            pl.BlockSpec((1, in_dim), lambda i: (0, 0)),
            pl.BlockSpec((1, in_dim), lambda i: (0, 0)),
            pl.BlockSpec((in_dim, out_dim), lambda i: (0, 0)),
        ],
        out_specs=pl.BlockSpec((tile_n, out_dim), lambda i: (i, 0)),
        compiler_params=_mosaic_params([
            ((tile_n, in_dim), z.dtype),
            ((1, in_dim), jnp.float32),
            ((1, in_dim), jnp.float32),
            ((in_dim, out_dim), w.dtype),
            ((tile_n, out_dim), jnp.bfloat16),
        ]),
    )(z, scale, shift, w)


def _run_aggregate_stats(a_hat, zw, b, tile_n, n_valid):
    n_pad = a_hat.shape[0]
    h_dim = zw.shape[1]
    num_tiles = n_pad // tile_n
    kernel = functools.partial(_aggregate_stats_kernel,
                               n_valid=n_valid, tile_n=tile_n)
    return pl.pallas_call(
        kernel,
        out_shape=(
            jax.ShapeDtypeStruct((n_pad, h_dim), jnp.float32),
            jax.ShapeDtypeStruct((num_tiles, 1, h_dim), jnp.float32),
            jax.ShapeDtypeStruct((num_tiles, 1, h_dim), jnp.float32),
        ),
        grid=(num_tiles,),
        in_specs=[
            pl.BlockSpec((tile_n, n_pad), lambda i: (i, 0)),
            pl.BlockSpec((n_pad, h_dim), lambda i: (0, 0)),
            pl.BlockSpec((1, h_dim), lambda i: (0, 0)),
        ],
        out_specs=(
            pl.BlockSpec((tile_n, h_dim), lambda i: (i, 0)),
            pl.BlockSpec((1, 1, h_dim), lambda i: (i, 0, 0)),
            pl.BlockSpec((1, 1, h_dim), lambda i: (i, 0, 0)),
        ),
        compiler_params=_mosaic_params([
            ((tile_n, n_pad), a_hat.dtype),
            ((n_pad, h_dim), zw.dtype),
            ((1, h_dim), jnp.float32),
            ((tile_n, h_dim), jnp.float32),
            ((1, 1, h_dim), jnp.float32),
            ((1, 1, h_dim), jnp.float32),
        ]),
    )(a_hat, zw, b)


def _run_aggregate_head(a_hat, zw, b, wf, bf, tile_n):
    n_pad = a_hat.shape[0]
    h_dim = zw.shape[1]
    o_dim = wf.shape[1]
    return pl.pallas_call(
        _aggregate_head_kernel,
        out_shape=jax.ShapeDtypeStruct((n_pad, o_dim), jnp.float32),
        grid=(n_pad // tile_n,),
        in_specs=[
            pl.BlockSpec((tile_n, n_pad), lambda i: (i, 0)),
            pl.BlockSpec((n_pad, h_dim), lambda i: (0, 0)),
            pl.BlockSpec((1, h_dim), lambda i: (0, 0)),
            pl.BlockSpec((h_dim, o_dim), lambda i: (0, 0)),
            pl.BlockSpec((1, o_dim), lambda i: (0, 0)),
        ],
        out_specs=pl.BlockSpec((tile_n, o_dim), lambda i: (i, 0)),
        compiler_params=_mosaic_params([
            ((tile_n, n_pad), a_hat.dtype),
            ((n_pad, h_dim), zw.dtype),
            ((1, h_dim), jnp.float32),
            ((h_dim, o_dim), wf.dtype),
            ((1, o_dim), jnp.float32),
            ((tile_n, o_dim), jnp.float32),
        ]),
    )(a_hat, zw, b, wf, bf)


# --------------------------------------------------------------------------
# Forward pass
# --------------------------------------------------------------------------
def gnn_fraud_forward(x, edge_index, params, *, tile_n=256):
    """x: [N, Din] float32, edge_index: [2, E] int32 (row0=src, row1=dst)."""
    n, din = x.shape
    w1, b1, gamma, beta, w2, b2, wf, bf = params
    out_dim = wf.shape[1]

    # ---- tiling / lane padding ------------------------------------------
    tile_n = max(16, _round_up(min(tile_n, _round_up(n, 16)), 16))
    n_pad = _round_up(n, tile_n)
    d_pad = _round_up(din, LANE)
    h_pad = _round_up(w1.shape[1], LANE)
    o_pad = _round_up(out_dim, LANE)

    # ---- glue: symmetric-normalized adjacency with self loops (bf16) ------
    src, dst = edge_index[0], edge_index[1]
    adj = jnp.zeros((n, n), jnp.float32).at[dst, src].set(1.0)
    adj = adj + jnp.eye(n, dtype=jnp.float32)            # add self loops
    deg = jnp.sum(adj, axis=1)
    dinv = jax.lax.rsqrt(jnp.maximum(deg, 1e-12))
    a_hat = adj * dinv[:, None] * dinv[None, :]           # D^-1/2 (A+I) D^-1/2
    a_hat = _pad2(a_hat, n_pad, n_pad).astype(jnp.bfloat16)

    x_p = _pad2(x, n_pad, d_pad).astype(jnp.bfloat16)
    w1_p = _pad2(w1, d_pad, h_pad).astype(jnp.bfloat16)
    w2_p = _pad2(w2, h_pad, h_pad).astype(jnp.bfloat16)
    wf_p = _pad2(wf, h_pad, o_pad).astype(jnp.float32)
    b1_p = _pad2(b1, 1, h_pad).astype(jnp.float32)
    b2_p = _pad2(b2, 1, h_pad).astype(jnp.float32)
    bf_p = _pad2(bf, 1, o_pad).astype(jnp.float32)
    gamma_p = _pad2(gamma, 1, h_pad).astype(jnp.float32)
    beta_p = _pad2(beta, 1, h_pad).astype(jnp.float32)

    one_d = jnp.ones((1, d_pad), jnp.float32)
    zero_d = jnp.zeros((1, d_pad), jnp.float32)

    # ---- layer 1: XW1, then H1 = relu(A_hat @ XW1 + b1) + BN partials ------
    xw1 = _run_transform(x_p, one_d, zero_d, w1_p, tile_n)
    h1, part_sum, part_sq = _run_aggregate_stats(a_hat, xw1, b1_p, tile_n, n)

    # ---- BatchNorm1d (global batch stats over the N real rows), folded -----
    if n > 1:
        total = jnp.sum(part_sum, axis=(0, 1))
        total_sq = jnp.sum(part_sq, axis=(0, 1))
        mean = total / n
        var = jnp.maximum(total_sq / n - mean * mean, 0.0)   # biased variance
        inv_std = jax.lax.rsqrt(var + BN_EPS)
        scale_v = gamma_p[0] * inv_std
        shift_v = beta_p[0] - mean * scale_v
    else:
        scale_v = jnp.ones((h_pad,), jnp.float32)
        shift_v = jnp.zeros((h_pad,), jnp.float32)
    scale = scale_v[None, :]
    shift = shift_v[None, :]

    # ---- layer 2: Z2 = BN(H1) @ W2; H2 = relu(A_hat @ Z2 + b2); fc+sigmoid --
    z2 = _run_transform(h1, scale, shift, w2_p, tile_n)
    y = _run_aggregate_head(a_hat, z2, b2_p, wf_p, bf_p, tile_n)

    return y[:n, :out_dim]


def init_params(key, input_dim, hidden_dim, output_dim):
    ks = jax.random.split(key, 6)
    w1 = jax.random.normal(ks[0], (input_dim, hidden_dim), jnp.float32) * 0.1
    b1 = jnp.zeros((1, hidden_dim), jnp.float32)
    gamma = jnp.ones((1, hidden_dim), jnp.float32)       # BatchNorm1d weight
    beta = jnp.zeros((1, hidden_dim), jnp.float32)       # BatchNorm1d bias
    w2 = jax.random.normal(ks[1], (hidden_dim, hidden_dim), jnp.float32) * 0.1
    b2 = jnp.zeros((1, hidden_dim), jnp.float32)
    wf = jax.random.normal(ks[2], (hidden_dim, output_dim), jnp.float32) * 0.1
    bf = jnp.zeros((1, output_dim), jnp.float32)
    return (w1, b1, gamma, beta, w2, b2, wf, bf)


def _reference_forward(x, edge_index, params):
    """Pure-JAX f32 reference with identical semantics (for a loose check)."""
    w1, b1, gamma, beta, w2, b2, wf, bf = params
    n = x.shape[0]
    src, dst = edge_index[0], edge_index[1]
    adj = jnp.zeros((n, n), jnp.float32).at[dst, src].set(1.0)
    adj = adj + jnp.eye(n, dtype=jnp.float32)
    deg = jnp.sum(adj, axis=1)
    dinv = jax.lax.rsqrt(jnp.maximum(deg, 1e-12))
    a_hat = adj * dinv[:, None] * dinv[None, :]
    h = jnp.maximum(a_hat @ (x @ w1) + b1, 0.0)
    if n > 1:
        mean = jnp.mean(h, axis=0, keepdims=True)
        var = jnp.mean((h - mean) ** 2, axis=0, keepdims=True)
        h = (h - mean) * jax.lax.rsqrt(var + BN_EPS) * gamma + beta
    h = jnp.maximum(a_hat @ (h @ w2) + b2, 0.0)
    return jax.nn.sigmoid(h @ wf + bf)


if __name__ == "__main__":
    key = jax.random.PRNGKey(0)
    N = 64           # nodes
    INPUT_DIM = 5    # matches module's input_dim
    HIDDEN_DIM = 32
    OUTPUT_DIM = 2

    kx, kp = jax.random.split(key)
    x = jax.random.normal(kx, (N, INPUT_DIM), jnp.float32)

    # deterministic small graph: ring + chords, edge_index = [2, E]
    idx = jnp.arange(N, dtype=jnp.int32)
    src = jnp.concatenate([idx, idx])
    dst = jnp.concatenate([(idx + 1) % N, (idx + 5) % N])
    edge_index = jnp.stack([src, dst], axis=0)

    params = init_params(kp, INPUT_DIM, HIDDEN_DIM, OUTPUT_DIM)

    # tile_n=16 -> 4 row tiles, exercising the pipelined/parallel grid path
    out = gnn_fraud_forward(x, edge_index, params, tile_n=16)
    jax.block_until_ready(out)

    assert out.shape == (N, OUTPUT_DIM)
    assert bool(jnp.all((out >= 0.0) & (out <= 1.0)))

    ref = _reference_forward(x, edge_index, params)
    assert bool(jnp.all(jnp.abs(out - ref) < 2e-2)), "mismatch vs f32 reference"

    print("KERNEL_OK")
</pallas_src>

<mosaic_0001>
module attributes {stable_mosaic.version = 11 : i64} {
  func.func @_affine_transform_kernel(%arg0: i32, %arg1: memref<16x128xbf16, #tpu.memory_space<vmem>>, %arg2: memref<1x128xf32, #tpu.memory_space<vmem>>, %arg3: memref<1x128xf32, #tpu.memory_space<vmem>>, %arg4: memref<128x128xbf16, #tpu.memory_space<vmem>>, %arg5: memref<16x128xbf16, #tpu.memory_space<vmem>>) attributes {dimension_semantics = [#tpu.dimension_semantics<parallel>], iteration_bounds = array<i64: 4>, scalar_prefetch = 0 : i64, scratch_operands = 0 : i64, tpu.core_type = #tpu.core_type<tc>, window_params = [{transform_indices = @transform_0, window_bounds = array<i64: 16, 128>}, {pipeline_mode = #tpu.pipeline_mode<synchronous>, transform_indices = @transform_1, window_bounds = array<i64: 1, 128>}, {pipeline_mode = #tpu.pipeline_mode<synchronous>, transform_indices = @transform_2, window_bounds = array<i64: 1, 128>}, {pipeline_mode = #tpu.pipeline_mode<synchronous>, transform_indices = @transform_3, window_bounds = array<i64: 128, 128>}, {transform_indices = @transform_4, window_bounds = array<i64: 16, 128>}]} {
    %c0 = arith.constant 0 : index
    %c0_0 = arith.constant 0 : index
    %0 = vector.load %arg1[%c0, %c0_0] : memref<16x128xbf16, #tpu.memory_space<vmem>>, vector<16x128xbf16>
    %1 = arith.extf %0 : vector<16x128xbf16> to vector<16x128xf32>
    %c0_1 = arith.constant 0 : index
    %c0_2 = arith.constant 0 : index
    %2 = vector.load %arg2[%c0_1, %c0_2] : memref<1x128xf32, #tpu.memory_space<vmem>>, vector<1x128xf32>
    %3 = vector.broadcast %2 : vector<1x128xf32> to vector<16x128xf32>
    %4 = arith.mulf %1, %3 : vector<16x128xf32>
    %c0_3 = arith.constant 0 : index
    %c0_4 = arith.constant 0 : index
    %5 = vector.load %arg3[%c0_3, %c0_4] : memref<1x128xf32, #tpu.memory_space<vmem>>, vector<1x128xf32>
    %6 = vector.broadcast %5 : vector<1x128xf32> to vector<16x128xf32>
    %7 = arith.addf %4, %6 : vector<16x128xf32>
    %8 = arith.truncf %7 : vector<16x128xf32> to vector<16x128xbf16>
    %c0_5 = arith.constant 0 : index
    %c0_6 = arith.constant 0 : index
    %9 = vector.load %arg4[%c0_5, %c0_6] : memref<128x128xbf16, #tpu.memory_space<vmem>>, vector<128x128xbf16>
    %cst = arith.constant dense<0.000000e+00> : vector<16x128xf32>
    %10 = tpu.matmul %8, %9, %cst {dimension_numbers = #tpu.dot_dimension_numbers<[1], [0], [0], [1], [0, 0, 1, 1], [], []>} : vector<16x128xbf16>, vector<128x128xbf16>, vector<16x128xf32> -> vector<16x128xf32>
    %11 = arith.truncf %10 : vector<16x128xf32> to vector<16x128xbf16>
    %c0_7 = arith.constant 0 : index
    %c0_8 = arith.constant 0 : index
    %12 = vector.load %arg5[%c0_7, %c0_8] : memref<16x128xbf16, #tpu.memory_space<vmem>>, vector<16x128xbf16>
    tpu.vector_store %arg5[%c0_7, %c0_8], %11 {strides = array<i32>} : memref<16x128xbf16, #tpu.memory_space<vmem>>, vector<16x128xbf16>,
    return
  }
  func.func @transform_0(%arg0: i32) -> (i32, i32) {
    %c0_i32 = arith.constant 0 : i32
    %c0_i32_0 = arith.constant 0 : i32
    return %arg0, %c0_i32 : i32, i32
  }
  func.func @transform_1(%arg0: i32) -> (i32, i32) {
    %c0_i32 = arith.constant 0 : i32
    %c0_i32_0 = arith.constant 0 : i32
    %c0_i32_1 = arith.constant 0 : i32
    return %c0_i32, %c0_i32_0 : i32, i32
  }
  func.func @transform_2(%arg0: i32) -> (i32, i32) {
    %c0_i32 = arith.constant 0 : i32
    %c0_i32_0 = arith.constant 0 : i32
    %c0_i32_1 = arith.constant 0 : i32
    return %c0_i32, %c0_i32_0 : i32, i32
  }
  func.func @transform_3(%arg0: i32) -> (i32, i32) {
    %c0_i32 = arith.constant 0 : i32
    %c0_i32_0 = arith.constant 0 : i32
    %c0_i32_1 = arith.constant 0 : i32
    return %c0_i32, %c0_i32_0 : i32, i32
  }
  func.func @transform_4(%arg0: i32) -> (i32, i32) {
    %c0_i32 = arith.constant 0 : i32
    %c0_i32_0 = arith.constant 0 : i32
    return %arg0, %c0_i32 : i32, i32
  }
}

</mosaic_0001>

<llo_original>
// kernel: tpu_custom_call.1
$region0: #{tpu_custom_call.1}
  #allocation0 [shape = 'u32[]', space=smem, size = 0x4, offset = 0x4, fixed_abs, tag = 'smem constant byte address 0x4 - core index']
  #allocation1 [shape = 'u32[144,128]{1,0:T(1,128)}', space=vmem, size = 0x12000, scoped, tag = 'internal scratch']
  %s0 = inlined_call_operand.hbm [shape: bf16[64,128], index: 0, kind: input, shape index: {}]
  %s1 = inlined_call_operand.vmem [shape: f32[1,128], index: 1, kind: input, shape index: {}]
  %s2 = inlined_call_operand.vmem [shape: f32[1,128], index: 2, kind: input, shape index: {}]
  %s3 = inlined_call_operand.hbm [shape: bf16[128,128], index: 3, kind: input, shape index: {}]
  %s4 = inlined_call_operand.hbm [shape: bf16[64,128], index: 4, kind: output, shape index: {}]
  %s5 = sld [smem:[#allocation0]]
  $region57: #{tpu_custom_call.1} parent=0
    _
  %s7 = ssub.s32 1, %s5
  %s8 = scalar_select 0, %s7, %s5
  $region1: #{tpu_custom_call.1} parent=0
    #allocation2 [shape = 'u8[8192]{0}', space=vmem, size = 0x2000, scoped, tag = 'input window, operand 0']
    #allocation3 [shape = 's32[2]{0}', space=sflag, size = 0x8, scoped, tag = 'scoped memory for tpu_custom_call.1']
    #allocation4 [shape = 's32[2]{0}', space=sflag, size = 0x8, scoped, tag = 'scoped memory for tpu_custom_call.1']
    #allocation5 [shape = 'u8[32768]{0}', space=vmem, size = 0x8000, scoped, tag = 'input window, operand 3, single buffered']
    #allocation6 [shape = 's32[1]{0}', space=sflag, size = 0x4, scoped, tag = 'scoped memory for tpu_custom_call.1']
    #allocation7 [shape = 'u8[8192]{0}', space=vmem, size = 0x2000, scoped, tag = 'output window, operand 0']
    %9 = vsyncpa [#allocation3], 0
    %s10 = scalar_lea.sflag [#allocation3], 1
    %11 = vsyncpa %s10, 0
    %12 = vsyncpa [#allocation6], 0
    %13 = vsyncpa [#allocation4], 0
    %s14 = scalar_lea.sflag [#allocation4], 1
    %15 = vsyncpa %s14, 0
    loop: start=0, step=1, limit=6
    $region2: #{tpu_custom_call.1} parent=1 // loop_pre_header
      _
    $region3: #{tpu_custom_call.1} parent=1 // loop_header
      %s17 = sphi 0, %s21
      %p18 = scmp.ge.s32.totalorder %s17, 6
      %s27 = sphi 0, %s29
      %s30 = sphi 0, %s27
      %s31 = sphi 0, %s30
      %s47 = sphi 0, %s31
      %s51 = sphi 0, %s51
      %s53 = sphi 0, %s51
      %s54 = sphi 0, %s53
      %s68 = sphi 0, %s54
      %s72 = sphi 0, %s72
      %s74 = sphi 0, %s72
      %s75 = sphi 0, %s74
      %s89 = sphi 0, %s75
      %s93 = sphi 0, %s93
      %s95 = sphi 0, %s93
      %s96 = sphi 0, %s95
      %s110 = sphi 0, %s96
      %s116 = sphi 0, %s118
      %s119 = sphi 0, %s116
      %s120 = sphi 0, %s119
      %s136 = sphi 0, %s120
    $region4: #{tpu_custom_call.1} parent=1 // loop_header_branch
      %20 = sbr.rel (%p18) target = $region8
    $region5: #{tpu_custom_call.1} parent=1 // loop_body
      %s22 = ssub.s32 %s17, 1
      %s23 = ssub.s32 %s17, 2
      %s24 = sadd.s32 %s17, 1
      %s25 = ssub.s32 %s17, %s24
      %p26 = scmp.eq.s32.totalorder %s25, 0
      %s28 = sadd.s32 %s27, 1
      %s29 = scalar_select %p26, %s27, %s28
      %p32 = pneg %p26
      %p33 = scmp.eq.s32.totalorder %s17, 3
      %p34 = por %p32, %p33
      %p35 = scmp.ne.s32.totalorder %s27, %s30
      %p36 = scmp.eq.s32.totalorder %s17, 0
      %p37 = por %p35, %p36
      %p38 = scmp.ne.s32.totalorder %s27, %s30
      %p39 = scmp.eq.s32.totalorder %s22, 3
      %p40 = por %p38, %p39
      %p41 = scmp.ne.s32.totalorder %s30, %s31
      %p42 = scmp.eq.s32.totalorder %s22, 0
      %p43 = por %p41, %p42
      %p44 = scmp.ne.s32.totalorder %s30, %s31
      %p45 = scmp.eq.s32.totalorder %s23, 3
      %p46 = por %p44, %p45
      %p48 = scmp.ne.s32.totalorder %s31, %s47
      %p49 = scmp.eq.s32.totalorder %s23, 0
      %p50 = por %p48, %p49
      %s52 = sadd.s32 %s51, 1
      %p55 = scmp.eq.s32.totalorder %s17, 3
      %p56 = scmp.ne.s32.totalorder %s51, %s53
      %p57 = scmp.eq.s32.totalorder %s17, 0
      %p58 = por %p56, %p57
      %p59 = scmp.ne.s32.totalorder %s51, %s53
      %p60 = scmp.eq.s32.totalorder %s22, 3
      %p61 = por %p59, %p60
      %p62 = scmp.ne.s32.totalorder %s53, %s54
      %p63 = scmp.eq.s32.totalorder %s22, 0
      %p64 = por %p62, %p63
      %p65 = scmp.ne.s32.totalorder %s53, %s54
      %p66 = scmp.eq.s32.totalorder %s23, 3
      %p67 = por %p65, %p66
      %p69 = scmp.ne.s32.totalorder %s54, %s68
      %p70 = scmp.eq.s32.totalorder %s23, 0
      %p71 = por %p69, %p70
      %s73 = sadd.s32 %s72, 1
      %p76 = scmp.eq.s32.totalorder %s17, 3
      %p77 = scmp.ne.s32.totalorder %s72, %s74
      %p78 = scmp.eq.s32.totalorder %s17, 0
      %p79 = por %p77, %p78
      %p80 = scmp.ne.s32.totalorder %s72, %s74
      %p81 = scmp.eq.s32.totalorder %s22, 3
      %p82 = por %p80, %p81
      %p83 = scmp.ne.s32.totalorder %s74, %s75
      %p84 = scmp.eq.s32.totalorder %s22, 0
      %p85 = por %p83, %p84
      %p86 = scmp.ne.s32.totalorder %s74, %s75
      %p87 = scmp.eq.s32.totalorder %s23, 3
      %p88 = por %p86, %p87
      %p90 = scmp.ne.s32.totalorder %s75, %s89
      %p91 = scmp.eq.s32.totalorder %s23, 0
      %p92 = por %p90, %p91
      %s94 = sadd.s32 %s93, 1
      %p97 = scmp.eq.s32.totalorder %s17, 3
      %p98 = scmp.ne.s32.totalorder %s93, %s95
      %p99 = scmp.eq.s32.totalorder %s17, 0
      %p100 = por %p98, %p99
      %p101 = scmp.ne.s32.totalorder %s93, %s95
      %p102 = scmp.eq.s32.totalorder %s22, 3
      %p103 = por %p101, %p102
      %p104 = scmp.ne.s32.totalorder %s95, %s96
      %p105 = scmp.eq.s32.totalorder %s22, 0
      %p106 = por %p104, %p105
      %p107 = scmp.ne.s32.totalorder %s95, %s96
      %p108 = scmp.eq.s32.totalorder %s23, 3
      %p109 = por %p107, %p108
      %p111 = scmp.ne.s32.totalorder %s96, %s110
      %p112 = scmp.eq.s32.totalorder %s23, 0
      %p113 = por %p111, %p112
      %s114 = ssub.s32 %s17, %s24
      %p115 = scmp.eq.s32.totalorder %s114, 0
      %s117 = sadd.s32 %s116, 1
      %s118 = scalar_select %p115, %s116, %s117
      %p121 = pneg %p115
      %p122 = scmp.eq.s32.totalorder %s17, 3
      %p123 = por %p121, %p122
      %p124 = scmp.ne.s32.totalorder %s116, %s119
      %p125 = scmp.eq.s32.totalorder %s17, 0
      %p126 = por %p124, %p125
      %p127 = scmp.ne.s32.totalorder %s116, %s119
      %p128 = scmp.eq.s32.totalorder %s22, 3
      %p129 = por %p127, %p128
      %p130 = scmp.ne.s32.totalorder %s119, %s120
      %p131 = scmp.eq.s32.totalorder %s22, 0
      %p132 = por %p130, %p131
      %p133 = scmp.ne.s32.totalorder %s119, %s120
      %p134 = scmp.eq.s32.totalorder %s23, 3
      %p135 = por %p133, %p134
      %p137 = scmp.ne.s32.totalorder %s120, %s136
      %p138 = scmp.eq.s32.totalorder %s23, 0
      %p139 = por %p137, %p138
      %p140 = scmp.le.s32.totalorder 1, %s17
      %p141 = scmp.lt.s32.totalorder %s17, 5
      %p142 = pnand %p140, %p141
      %p143 = pneg %p142
      // Predicated region
      $region9: #{tpu_custom_call.1} parent=5 // pred_check
        _
      $region10: #{tpu_custom_call.1} parent=5 // pred_check_branch
        %145 = sbr.rel (%p142) target = $region12
      $region11: #{tpu_custom_call.1} parent=5 // pred_region
        %s146 = ssub.s32 %s17, 1
        // Predicated region
        $region13: #{tpu_custom_call.1} parent=11 // pred_check
          %p147 = pneg %p64
        $region14: #{tpu_custom_call.1} parent=11 // pred_check_branch
          %149 = sbr.rel (%p147) target = $region16
        $region15: #{tpu_custom_call.1} parent=11 // pred_region
          _
        $region16: #{tpu_custom_call.1} parent=11 // pred_fallthru
          _
        // Predicated region
        $region17: #{tpu_custom_call.1} parent=11 // pred_check
          %p150 = pneg %p85
        $region18: #{tpu_custom_call.1} parent=11 // pred_check_branch
          %152 = sbr.rel (%p150) target = $region20
        $region19: #{tpu_custom_call.1} parent=11 // pred_region
          _
        $region20: #{tpu_custom_call.1} parent=11 // pred_fallthru
          _
        // Predicated region
        $region21: #{tpu_custom_call.1} parent=11 // pred_check
          %p153 = pneg %p106
        $region22: #{tpu_custom_call.1} parent=11 // pred_check_branch
          %155 = sbr.rel (%p153) target = $region24
        $region23: #{tpu_custom_call.1} parent=11 // pred_region
          %s157 = ssub.s32 1024, 1024
          %158 = vsyncadd [#allocation6], %s157
          %s159 = sshll.u32 [#allocation5], 4
          %s160 = int_to_ptr.vmem [resolvable:$true] %s159
          %165 = dma.hbm_to_vmem [thread:$0]  %s3, 1024, %s160, [#allocation6], 64, 64, 4
        $region24: #{tpu_custom_call.1} parent=11 // pred_fallthru
          _
      $region12: #{tpu_custom_call.1} parent=5 // pred_fallthru
        _
      %p166 = scmp.lt.s32.totalorder %s17, 4
      // Predicated region
      $region25: #{tpu_custom_call.1} parent=5 // pred_check
        %p167 = pneg %p166
      $region26: #{tpu_custom_call.1} parent=5 // pred_check_branch
        %169 = sbr.rel (%p167) target = $region28
      $region27: #{tpu_custom_call.1} parent=5 // pred_region
        // Predicated region
        $region29: #{tpu_custom_call.1} parent=27 // pred_check
          %p170 = pneg %p37
        $region30: #{tpu_custom_call.1} parent=27 // pred_check_branch
          %172 = sbr.rel (%p170) target = $region32
        $region31: #{tpu_custom_call.1} parent=27 // pred_region
          %s173 = sand.u32 %s27, 1
          %s174 = scalar_lea.sflag [#allocation3], %s173
          %s175 = sand.u32 %s27, 1
          %s176 = smul.addr %s175, 8
          %s177 = scalar_lea.vmem [#allocation2], %s176
          %s178 = smul.u32 2, %s17
          %s180 = ssub.s32 128, 128
          %181 = vsyncadd %s174, %s180
          %s182 = smul.addr %s178, 64
          %s183 = scalar_lea.hbm %s0, %s182
          %s184 = sshll.u32 %s177, 4
          %s185 = int_to_ptr.vmem [resolvable:$true] %s184
          %190 = dma.hbm_to_vmem [thread:$0]  %s183, 128, %s185, %s174, 64, 64, 4
        $region32: #{tpu_custom_call.1} parent=27 // pred_fallthru
          _
      $region28: #{tpu_custom_call.1} parent=5 // pred_fallthru
        _
      %p191 = scmp.le.s32.totalorder 1, %s17
      %p192 = scmp.lt.s32.totalorder %s17, 5
      %p193 = pnand %p191, %p192
      %p194 = pneg %p193
      // Predicated region
      $region33: #{tpu_custom_call.1} parent=5 // pred_check
        _
      $region34: #{tpu_custom_call.1} parent=5 // pred_check_branch
        %196 = sbr.rel (%p193) target = $region36
      $region35: #{tpu_custom_call.1} parent=5 // pred_region
        %s197 = ssub.s32 %s17, 1
        %s198 = sand.u32 %s30, 1
        %s199 = scalar_lea.sflag [#allocation3], %s198
        %s200 = sand.u32 %s30, 1
        %s201 = smul.addr %s200, 8
        %s202 = scalar_lea.vmem [#allocation2], %s201
        // Predicated region
        $region37: #{tpu_custom_call.1} parent=35 // pred_check
          %p203 = pneg %p43
        $region38: #{tpu_custom_call.1} parent=35 // pred_check_branch
          %205 = sbr.rel (%p203) target = $region40
        $region39: #{tpu_custom_call.1} parent=35 // pred_region
          %206 = dma.done %s199, 128
        $region40: #{tpu_custom_call.1} parent=35 // pred_fallthru
          _
        // Predicated region
        $region41: #{tpu_custom_call.1} parent=35 // pred_check
          %p207 = pneg %p106
        $region42: #{tpu_custom_call.1} parent=35 // pred_check_branch
          %209 = sbr.rel (%p207) target = $region44
        $region43: #{tpu_custom_call.1} parent=35 // pred_region
          %210 = dma.done [#allocation6], 1024
        $region44: #{tpu_custom_call.1} parent=35 // pred_fallthru
          _
        %s211 = sand.u32 %s30, 1
        %s212 = scalar_lea.sflag [#allocation3], %s211
        %s213 = sand.u32 %s30, 1
        %s214 = smul.addr %s213, 8
        %s215 = scalar_lea.vmem [#allocation2], %s214
        %p216 = pneg %p43
        %p217 = pneg %p40
        %p218 = pneg %p64
        %p219 = pneg %p61
        %p220 = pneg %p85
        %p221 = pneg %p82
        %p222 = pneg %p106
        %p223 = pneg %p103
        %p224 = pneg %p132
        %p225 = pneg %p129
        %s226 = sand.u32 %s119, 1
        %s227 = scalar_lea.sflag [#allocation4], %s226
        %s228 = sand.u32 %s119, 1
        %s229 = smul.addr %s228, 8
        %s230 = scalar_lea.vmem [#allocation7], %s229
        %s231 = smul.u32 2, %s22
        %s232 = smul.u32 2, %s22
        %v234 = vld [vmem:[%s202] sm:$0xf]
        %v235 = vld [vmem:[%s202 + $0x4] sm:$0xf]
        %v236 = vunpack.c.l.bf16 %v234
        %v237 = vunpack.c.l.bf16 %v235
        %v238 = vld [vmem:[%s1] sm:$0x1]
        %v240 = vlaneseq
        %v241 = vshrl.u32 %v240, 7
        %v242 = vsub.s32 0, %v241
        %v243 = vrot.slane %v238, %v242
        %v245 = vmul.f32 %v236, %v243
        %v246 = vmul.f32 %v237, %v243
        %v247 = vld [vmem:[%s2] sm:$0x1]
        %v249 = vlaneseq
        %v250 = vshrl.u32 %v249, 7
        %v251 = vsub.s32 0, %v250
        %v252 = vrot.slane %v247, %v251
        %v254 = vadd.f32 %v245, %v252
        %v255 = vadd.f32 %v246, %v252
        %v256 = vpack.c.bf16 %v255, %v254
        %v257 = vld [vmem:[#allocation5] sm:$0xf]
        %v258 = vld [vmem:[#allocation5 + $0x4] sm:$0xf]
        %v259 = vld [vmem:[#allocation5 + $0x8] sm:$0xf]
        %v260 = vld [vmem:[#allocation5 + $0xc] sm:$0xf]
        %v261 = vld [vmem:[#allocation5 + $0x10] sm:$0xf]
        %v262 = vld [vmem:[#allocation5 + $0x14] sm:$0xf]
        %v263 = vld [vmem:[#allocation5 + $0x18] sm:$0xf]
        %v264 = vld [vmem:[#allocation5 + $0x1c] sm:$0xf]
        %v265 = vld [vmem:[#allocation5 + $0x20] sm:$0xf]
        %v266 = vld [vmem:[#allocation5 + $0x24] sm:$0xf]
        %v267 = vld [vmem:[#allocation5 + $0x28] sm:$0xf]
        %v268 = vld [vmem:[#allocation5 + $0x2c] sm:$0xf]
        %v269 = vld [vmem:[#allocation5 + $0x30] sm:$0xf]
        %v270 = vld [vmem:[#allocation5 + $0x34] sm:$0xf]
        %v271 = vld [vmem:[#allocation5 + $0x38] sm:$0xf]
        %v272 = vld [vmem:[#allocation5 + $0x3c] sm:$0xf]
        %v289 = vunpack.c.l.b16 %v257
        %v290 = vunpack.c.l.b16 %v258
        %v291 = vunpack.c.l.b16 %v259
        %v292 = vunpack.c.l.b16 %v260
        %v293 = vunpack.c.l.b16 %v261
        %v294 = vunpack.c.l.b16 %v262
        %v295 = vunpack.c.l.b16 %v263
        %v296 = vunpack.c.l.b16 %v264
        %v297 = vunpack.c.l.b16 %v265
        %v298 = vunpack.c.l.b16 %v266
        %v299 = vunpack.c.l.b16 %v267
        %v300 = vunpack.c.l.b16 %v268
        %v301 = vunpack.c.l.b16 %v269
        %v302 = vunpack.c.l.b16 %v270
        %v303 = vunpack.c.l.b16 %v271
        %v304 = vunpack.c.l.b16 %v272
        %v305 = vpack.c.b16 %v290, %v289
        %v306 = vpack.c.b16 %v292, %v291
        %v307 = vpack.c.b16 %v294, %v293
        %v308 = vpack.c.b16 %v296, %v295
        %v309 = vpack.c.b16 %v298, %v297
        %v310 = vpack.c.b16 %v300, %v299
        %v311 = vpack.c.b16 %v302, %v301
        %v312 = vpack.c.b16 %v304, %v303
        %321 = vmatprep.subr.bf16.mxu0 0
        %322 = vmatpush1.bf16.msra.mxu0 %v305
        %323 = vmatprep.subr.bf16.mxu0 0
        %324 = vmatpush1.bf16.msra.mxu0 %v306
        %325 = vmatprep.subr.bf16.mxu0 0
        %326 = vmatpush1.bf16.msra.mxu0 %v307
        %327 = vmatprep.subr.bf16.mxu0 0
        %328 = vmatpush1.bf16.msra.mxu0 %v308
        %329 = vmatprep.subr.bf16.mxu0 0
        %330 = vmatpush1.bf16.msra.mxu0 %v309
        %331 = vmatprep.subr.bf16.mxu0 0
        %332 = vmatpush1.bf16.msra.mxu0 %v310
        %333 = vmatprep.subr.bf16.mxu0 0
        %334 = vmatpush1.bf16.msra.mxu0 %v311
        %335 = vmatprep.subr.bf16.mxu0 0
        %336 = vmatpush1.bf16.msra.mxu0 %v312
        %337 = vmatprep.subr.bf16.mxu0 0
        %338 = vmatpush1.bf16.msra.mxu0 0
        %339 = vmatprep.subr.bf16.mxu0 0
        %340 = vmatpush1.bf16.msra.mxu0 0
        %341 = vmatprep.subr.bf16.mxu0 0
        %342 = vmatpush1.bf16.msra.mxu0 0
        %343 = vmatprep.subr.bf16.mxu0 0
        %344 = vmatpush1.bf16.msra.mxu0 0
        %345 = vmatprep.subr.bf16.mxu0 0
        %346 = vmatpush1.bf16.msra.mxu0 0
        %347 = vmatprep.subr.bf16.mxu0 0
        %348 = vmatpush1.bf16.msra.mxu0 0
        %349 = vmatprep.subr.bf16.mxu0 0
        %350 = vmatpush1.bf16.msra.mxu0 0
        %351 = vmatprep.subr.bf16.mxu0 0
        %352 = vmatpush1.bf16.msra.mxu0 0
        %353 = vmatprep.mubr.bf16.mxu0 0
        %354 = vmatmul.mubr.bf16.gmra.mrb[0].mxu0 %v256
        %v355 = vpop.f32.mrb[0].mxu0
        %v356 = vadd.f32 0.0, %v355
        %v357 = vpop.f32.mrb[0].mxu0
        %v358 = vpop.f32.mrb[0].mxu0
        %v359 = vadd.f32 0.0, %v358
        %v360 = vpop.f32.mrb[0].mxu0
        %361 = vdwg.mxu0
        %v362 = vpack.c.bf16 %v359, %v356
        %v364 = vunpack.c.l.b16 %v362
        %v365 = vunpack.c.h.b16 %v362
        %v366 = vpack.c.b16 %v364, %v364
        %v367 = vpack.c.b16 %v365, %v365
        %370 = vst [vmem:[%s230] sm:$0xf] %v366
        %371 = vst [vmem:[%s230 + $0x4] sm:$0xf] %v367
        %s372 = sand.u32 %s119, 1
        %s373 = scalar_lea.sflag [#allocation4], %s372
        %s374 = sand.u32 %s119, 1
        %s375 = smul.addr %s374, 8
        %s376 = scalar_lea.vmem [#allocation7], %s375
        // Predicated region
        $region45: #{tpu_custom_call.1} parent=35 // pred_check
          %p377 = pneg %p129
        $region46: #{tpu_custom_call.1} parent=35 // pred_check_branch
          %379 = sbr.rel (%p377) target = $region48
        $region47: #{tpu_custom_call.1} parent=35 // pred_region
          %s380 = smul.u32 2, %s22
          %s382 = ssub.s32 128, 128
          %383 = vsyncadd %s373, %s382
          %s384 = smul.addr %s380, 64
          %s385 = scalar_lea.hbm %s4, %s384
          %s386 = sshll.u32 %s376, 4
          %s387 = int_to_ptr.vmem [resolvable:$true] %s386
          %392 = dma.vmem_to_hbm [thread:$0]  %s387, 128, %s385, %s373, 64, 64, 4
        $region48: #{tpu_custom_call.1} parent=35 // pred_fallthru
          _
      $region36: #{tpu_custom_call.1} parent=5 // pred_fallthru
        _
      %p393 = scmp.le.s32.totalorder 2, %s17
      // Predicated region
      $region49: #{tpu_custom_call.1} parent=5 // pred_check
        %p394 = pneg %p393
      $region50: #{tpu_custom_call.1} parent=5 // pred_check_branch
        %396 = sbr.rel (%p394) target = $region52
      $region51: #{tpu_custom_call.1} parent=5 // pred_region
        %s397 = ssub.s32 %s17, 2
        // Predicated region
        $region53: #{tpu_custom_call.1} parent=51 // pred_check
          %p398 = pneg %p135
        $region54: #{tpu_custom_call.1} parent=51 // pred_check_branch
          %400 = sbr.rel (%p398) target = $region56
        $region55: #{tpu_custom_call.1} parent=51 // pred_region
          %s401 = sand.u32 %s120, 1
          %s402 = scalar_lea.sflag [#allocation4], %s401
          %s403 = sand.u32 %s120, 1
          %s404 = smul.addr %s403, 8
          %s405 = scalar_lea.vmem [#allocation7], %s404
          %406 = dma.done %s402, 128
        $region56: #{tpu_custom_call.1} parent=51 // pred_fallthru
          _
      $region52: #{tpu_custom_call.1} parent=5 // pred_fallthru
        _
    $region6: #{tpu_custom_call.1} parent=1 // loop_footer
      %s21 = sadd.s32 1, %s17
    $region7: #{tpu_custom_call.1} parent=1 // loop_footer_branch
      %16 = sbr.rel target = $region3
    $region8: #{tpu_custom_call.1} parent=1 // loop_exit
      _
    %407 = vsyncpa [#allocation3], 1
    %s408 = scalar_lea.sflag [#allocation3], 1
    %409 = vsyncpa %s408, 1
    %410 = vsyncpa [#allocation6], 1
    %411 = vsyncpa [#allocation4], 1
    %s412 = scalar_lea.sflag [#allocation4], 1
    %413 = vsyncpa %s412, 1

</llo_original>
